<compile_context>
chip_gen: v7x
topology: tpu7x:2x2x1
jax: 0.10.0
libtpu: 0.0.40
codegen_flags: <defaults>
</compile_context>

<pallas_src>
import functools
import math

import jax
import jax.numpy as jnp
from jax.experimental import pallas as pl
from jax.experimental.pallas import tpu as pltpu


# --------------------------------------------------------------------------
# helpers
# --------------------------------------------------------------------------
def _round_up(x, m):
    return (x + m - 1) // m * m


def _compiler_params(dimension_semantics, est_vmem_bytes):
    # Explicit scoped-VMEM limit derived from the tile footprint (with
    # headroom), clamped so it stays below v7x's 64 MiB physical VMEM.
    limit = int(min(max(2 * est_vmem_bytes, 32 * 1024 * 1024), 48 * 1024 * 1024))
    return pltpu.CompilerParams(
        dimension_semantics=dimension_semantics,
        vmem_limit_bytes=limit,
    )


# --------------------------------------------------------------------------
# Linear (x @ W^T + b) kernel: tiled matmul with f32 accumulator
# --------------------------------------------------------------------------
def _linear_kernel(x_ref, w_ref, b_ref, o_ref, acc_ref):
    kk = pl.program_id(2)

    @pl.when(kk == 0)
    def _():
        acc_ref[...] = jnp.zeros_like(acc_ref)

    # Native-dtype MXU matmul, f32 accumulation.
    acc_ref[...] += jnp.dot(x_ref[...], w_ref[...],
                            preferred_element_type=jnp.float32)

    @pl.when(kk == pl.num_programs(2) - 1)
    def _():
        o_ref[...] = (acc_ref[...] + b_ref[...]).astype(o_ref.dtype)


def linear_pallas(x2, w_t, bias=None, *, tm_max=256, tn_max=256, tk_max=512):
    """x2: (M, K); w_t: (K, N) (already-transposed weight); bias: (N,) or None."""
    M, K = x2.shape
    K2, N = w_t.shape
    assert K2 == K
    dtype = x2.dtype

    # Tile sizes: large M tile (sublane-aligned), lane-dense (128-multiple) N/K.
    tm = min(tm_max, _round_up(M, 8))
    tn = min(tn_max, _round_up(N, 128))
    tk = min(tk_max, _round_up(K, 128))

    Mp, Np, Kp = _round_up(M, tm), _round_up(N, tn), _round_up(K, tk)

    xp = jnp.pad(x2, ((0, Mp - M), (0, Kp - K))) if (Mp != M or Kp != K) else x2
    wp = jnp.pad(w_t, ((0, Kp - K), (0, Np - N))) if (Kp != K or Np != N) else w_t
    b = jnp.zeros((N,), jnp.float32) if bias is None else bias.astype(jnp.float32)
    bp = jnp.pad(b, (0, Np - N)).reshape(1, Np)

    grid = (Mp // tm, Np // tn, Kp // tk)

    itemsize = xp.dtype.itemsize
    est = 2 * ((tm * tk + tk * tn + tm * tn) * itemsize + tn * 4) + tm * tn * 4

    out = pl.pallas_call(
        _linear_kernel,
        out_shape=jax.ShapeDtypeStruct((Mp, Np), dtype),
        grid_spec=pltpu.PrefetchScalarGridSpec(
            num_scalar_prefetch=0,
            grid=grid,
            in_specs=[
                pl.BlockSpec((tm, tk), lambda i, j, k: (i, k)),
                pl.BlockSpec((tk, tn), lambda i, j, k: (k, j)),
                pl.BlockSpec((1, tn), lambda i, j, k: (0, j)),
            ],
            out_specs=pl.BlockSpec((tm, tn), lambda i, j, k: (i, j)),
            scratch_shapes=[pltpu.VMEM((tm, tn), jnp.float32)],
        ),
        compiler_params=_compiler_params(
            ("parallel", "parallel", "arbitrary"), est),
    )(xp, wp, bp)

    if Mp != M or Np != N:
        out = out[:M, :N]
    return out


# --------------------------------------------------------------------------
# Flash-attention forward (replaces xformers.ops.memory_efficient_attention)
# --------------------------------------------------------------------------
def _flash_attn_kernel(q_ref, k_ref, v_ref, o_ref, m_sc, l_sc, acc_sc,
                       *, scale, kv_len, tkv, needs_mask):
    ki = pl.program_id(2)

    @pl.when(ki == 0)
    def _():
        m_sc[...] = jnp.full_like(m_sc, -1e30)
        l_sc[...] = jnp.zeros_like(l_sc)
        acc_sc[...] = jnp.zeros_like(acc_sc)

    q = q_ref[0]                      # (tq, D)
    k = k_ref[0]                      # (tkv, D)
    s = jax.lax.dot_general(q, k, (((1,), (1,)), ((), ())),
                            preferred_element_type=jnp.float32)
    s = s * jnp.float32(scale)        # (tq, tkv)

    if needs_mask:
        kv_ids = ki * tkv + jax.lax.broadcasted_iota(jnp.int32, s.shape, 1)
        s = jnp.where(kv_ids < kv_len, s, jnp.float32(-1e30))

    m_prev = m_sc[...]                                   # (tq, 1)
    m_new = jnp.maximum(m_prev, s.max(axis=-1, keepdims=True))
    alpha = jnp.exp(m_prev - m_new)
    p = jnp.exp(s - m_new)
    l_sc[...] = alpha * l_sc[...] + p.sum(axis=-1, keepdims=True)
    acc_sc[...] = alpha * acc_sc[...] + jnp.dot(
        p.astype(v_ref.dtype), v_ref[0], preferred_element_type=jnp.float32)
    m_sc[...] = m_new

    @pl.when(ki == pl.num_programs(2) - 1)
    def _():
        o_ref[0] = (acc_sc[...] / l_sc[...]).astype(o_ref.dtype)


def flash_attention_pallas(q, k, v, *, scale, tq_max=256, tkv_max=256):
    """q: (BH, Sq, D); k, v: (BH, Skv, D). Returns (BH, Sq, D)."""
    BH, Sq, D = q.shape
    _, Skv, _ = k.shape
    dtype = q.dtype

    tq = min(tq_max, _round_up(Sq, 8))
    tkv = min(tkv_max, _round_up(Skv, 8))
    Sqp, Skvp = _round_up(Sq, tq), _round_up(Skv, tkv)

    qp = jnp.pad(q, ((0, 0), (0, Sqp - Sq), (0, 0))) if Sqp != Sq else q
    kp = jnp.pad(k, ((0, 0), (0, Skvp - Skv), (0, 0))) if Skvp != Skv else k
    vp = jnp.pad(v, ((0, 0), (0, Skvp - Skv), (0, 0))) if Skvp != Skv else v

    needs_mask = Skvp != Skv
    grid = (BH, Sqp // tq, Skvp // tkv)

    kernel = functools.partial(_flash_attn_kernel, scale=float(scale),
                               kv_len=Skv, tkv=tkv, needs_mask=needs_mask)

    itemsize = qp.dtype.itemsize
    est = 2 * (tq * D + 2 * tkv * D + tq * D) * itemsize + (tq * (D + 2)) * 4

    out = pl.pallas_call(
        kernel,
        out_shape=jax.ShapeDtypeStruct((BH, Sqp, D), dtype),
        grid_spec=pltpu.PrefetchScalarGridSpec(
            num_scalar_prefetch=0,
            grid=grid,
            in_specs=[
                pl.BlockSpec((1, tq, D), lambda b, qi, ki: (b, qi, 0)),
                pl.BlockSpec((1, tkv, D), lambda b, qi, ki: (b, ki, 0)),
                pl.BlockSpec((1, tkv, D), lambda b, qi, ki: (b, ki, 0)),
            ],
            out_specs=pl.BlockSpec((1, tq, D), lambda b, qi, ki: (b, qi, 0)),
            scratch_shapes=[
                pltpu.VMEM((tq, 1), jnp.float32),   # running max
                pltpu.VMEM((tq, 1), jnp.float32),   # running denom
                pltpu.VMEM((tq, D), jnp.float32),   # output accumulator
            ],
        ),
        compiler_params=_compiler_params(
            ("parallel", "parallel", "arbitrary"), est),
    )(qp, kp, vp)

    if Sqp != Sq:
        out = out[:, :Sq, :]
    return out


# --------------------------------------------------------------------------
# MemoryEfficientCrossAttention forward
# --------------------------------------------------------------------------
def memory_efficient_cross_attention(params, x, context=None, *, heads, dim_head):
    B, Sq, Dq = x.shape
    ctx = x if context is None else context
    _, Skv, Dc = ctx.shape
    inner = heads * dim_head

    x2 = x.reshape(B * Sq, Dq)
    c2 = ctx.reshape(B * Skv, Dc)

    # to_q (no bias).
    q = linear_pallas(x2, params["wq_t"])                 # (B*Sq, inner)
    # to_k and to_v fused into one matmul (weights concatenated at init),
    # so the context tensor is read from HBM once.
    kv = linear_pallas(c2, params["wkv_t"])               # (B*Skv, 2*inner)
    k, v = kv[:, :inner], kv[:, inner:]

    def split_heads(t, S):
        return (t.reshape(B, S, heads, dim_head)
                 .transpose(0, 2, 1, 3)
                 .reshape(B * heads, S, dim_head))

    qh, kh, vh = split_heads(q, Sq), split_heads(k, Skv), split_heads(v, Skv)

    oh = flash_attention_pallas(qh, kh, vh, scale=1.0 / math.sqrt(dim_head))

    o = (oh.reshape(B, heads, Sq, dim_head)
           .transpose(0, 2, 1, 3)
           .reshape(B * Sq, inner))

    out = linear_pallas(o, params["wo_t"], params["bo"])
    # TODO(synk): nn.Dropout is identity in eval mode / p=0.0; no kernel needed.
    # TODO(synk): the original module raises NotImplementedError for mask is
    # not None; masks are therefore not supported here either.
    return out.reshape(B, Sq, -1)


# --------------------------------------------------------------------------
# Pure-JAX reference for correctness checking
# --------------------------------------------------------------------------
def reference_forward(params, x, context, heads, dim_head):
    B, Sq, _ = x.shape
    ctx = x if context is None else context
    Skv = ctx.shape[1]
    inner = heads * dim_head
    hi = jax.lax.Precision.HIGHEST
    q = jnp.einsum("bsd,nd->bsn", x, params["wq"], precision=hi)
    k = jnp.einsum("bsd,nd->bsn", ctx, params["wk"], precision=hi)
    v = jnp.einsum("bsd,nd->bsn", ctx, params["wv"], precision=hi)
    q = q.reshape(B, Sq, heads, dim_head).transpose(0, 2, 1, 3)
    k = k.reshape(B, Skv, heads, dim_head).transpose(0, 2, 1, 3)
    v = v.reshape(B, Skv, heads, dim_head).transpose(0, 2, 1, 3)
    s = jnp.einsum("bhqd,bhkd->bhqk", q, k, precision=hi) / math.sqrt(dim_head)
    a = jax.nn.softmax(s, axis=-1)
    o = jnp.einsum("bhqk,bhkd->bhqd", a, v, precision=hi)
    o = o.transpose(0, 2, 1, 3).reshape(B, Sq, inner)
    return jnp.einsum("bsn,dn->bsd", o, params["wo"], precision=hi) + params["bo"]


if __name__ == "__main__":
    # Small shapes consistent with the module: cross-attention with
    # query_dim=32, context_dim=48, heads=2, dim_head=64 (inner=128).
    batch, seq_q, seq_kv = 2, 8, 12
    query_dim, context_dim = 32, 48
    heads, dim_head = 2, 64
    inner = heads * dim_head

    key = jax.random.PRNGKey(0)
    kx, kc, k1, k2, k3, k4, k5 = jax.random.split(key, 7)

    x = jax.random.normal(kx, (batch, seq_q, query_dim), jnp.float32)
    context = jax.random.normal(kc, (batch, seq_kv, context_dim), jnp.float32)

    # PyTorch nn.Linear layouts: weight (out_features, in_features).
    wq = jax.random.normal(k1, (inner, query_dim), jnp.float32) * 0.05
    wk = jax.random.normal(k2, (inner, context_dim), jnp.float32) * 0.05
    wv = jax.random.normal(k3, (inner, context_dim), jnp.float32) * 0.05
    wo = jax.random.normal(k4, (query_dim, inner), jnp.float32) * 0.05
    bo = jax.random.normal(k5, (query_dim,), jnp.float32) * 0.05

    params = {
        "wq": wq, "wk": wk, "wv": wv, "wo": wo, "bo": bo,
        # Transposed / fused weights cached once at init
        # (not re-transposed or re-concatenated per call).
        "wq_t": wq.T,
        "wkv_t": jnp.concatenate([wk.T, wv.T], axis=1),   # (context_dim, 2*inner)
        "wo_t": wo.T,
    }

    out = memory_efficient_cross_attention(params, x, context,
                                           heads=heads, dim_head=dim_head)
    out = jax.block_until_ready(out)

    ref = reference_forward(params, x, context, heads, dim_head)
    assert out.shape == (batch, seq_q, query_dim)
    max_err = float(jnp.max(jnp.abs(out - ref)))
    assert jnp.allclose(out, ref, atol=2e-3, rtol=2e-3), f"mismatch, max_err={max_err}"

    print("KERNEL_OK")
</pallas_src>

<mosaic_0001>
module attributes {stable_mosaic.version = 11 : i64} {
  func.func @_linear_kernel(%arg0: i32, %arg1: i32, %arg2: i32, %arg3: memref<16x128xf32, #tpu.memory_space<vmem>>, %arg4: memref<128x128xf32, #tpu.memory_space<vmem>>, %arg5: memref<1x128xf32, #tpu.memory_space<vmem>>, %arg6: memref<16x128xf32, #tpu.memory_space<vmem>>, %arg7: memref<16x128xf32, #tpu.memory_space<vmem>>) attributes {dimension_semantics = [#tpu.dimension_semantics<parallel>, #tpu.dimension_semantics<parallel>, #tpu.dimension_semantics<arbitrary>], iteration_bounds = array<i64: 1, 1, 1>, scalar_prefetch = 0 : i64, scratch_operands = 1 : i64, tpu.core_type = #tpu.core_type<tc>, window_params = [{transform_indices = @transform_0, window_bounds = array<i64: 16, 128>}, {transform_indices = @transform_1, window_bounds = array<i64: 128, 128>}, {transform_indices = @transform_2, window_bounds = array<i64: 1, 128>}, {transform_indices = @transform_3, window_bounds = array<i64: 16, 128>}]} {
    %c0_i32 = arith.constant 0 : i32
    %0 = arith.cmpi eq, %arg2, %c0_i32 : i32
    %1 = arith.extui %0 : i1 to i32
    %c0_i32_0 = arith.constant 0 : i32
    %2 = arith.cmpi ne, %1, %c0_i32_0 : i32
    scf.if %2 {
      %cst_10 = arith.constant 0.000000e+00 : f32
      %12 = vector.broadcast %cst_10 : f32 to vector<16x128xf32>
      %c0_11 = arith.constant 0 : index
      %c0_12 = arith.constant 0 : index
      %13 = vector.load %arg7[%c0_11, %c0_12] : memref<16x128xf32, #tpu.memory_space<vmem>>, vector<16x128xf32>
      tpu.vector_store %arg7[%c0_11, %c0_12], %12 {strides = array<i32>} : memref<16x128xf32, #tpu.memory_space<vmem>>, vector<16x128xf32>,
    } else {
    }
    %c0 = arith.constant 0 : index
    %c0_1 = arith.constant 0 : index
    %3 = vector.load %arg7[%c0, %c0_1] : memref<16x128xf32, #tpu.memory_space<vmem>>, vector<16x128xf32>
    %c0_2 = arith.constant 0 : index
    %c0_3 = arith.constant 0 : index
    %4 = vector.load %arg3[%c0_2, %c0_3] : memref<16x128xf32, #tpu.memory_space<vmem>>, vector<16x128xf32>
    %c0_4 = arith.constant 0 : index
    %c0_5 = arith.constant 0 : index
    %5 = vector.load %arg4[%c0_4, %c0_5] : memref<128x128xf32, #tpu.memory_space<vmem>>, vector<128x128xf32>
    %cst = arith.constant dense<0.000000e+00> : vector<16x128xf32>
    %6 = tpu.matmul %4, %5, %cst {dimension_numbers = #tpu.dot_dimension_numbers<[1], [0], [0], [1], [0, 0, 1, 1], [], []>} : vector<16x128xf32>, vector<128x128xf32>, vector<16x128xf32> -> vector<16x128xf32>
    %7 = arith.addf %3, %6 : vector<16x128xf32>
    %c0_6 = arith.constant 0 : index
    %c0_7 = arith.constant 0 : index
    %8 = vector.load %arg7[%c0_6, %c0_7] : memref<16x128xf32, #tpu.memory_space<vmem>>, vector<16x128xf32>
    tpu.vector_store %arg7[%c0_6, %c0_7], %7 {strides = array<i32>} : memref<16x128xf32, #tpu.memory_space<vmem>>, vector<16x128xf32>,
    %c0_i32_8 = arith.constant 0 : i32
    %9 = arith.cmpi eq, %arg2, %c0_i32_8 : i32
    %10 = arith.extui %9 : i1 to i32
    %c0_i32_9 = arith.constant 0 : i32
    %11 = arith.cmpi ne, %10, %c0_i32_9 : i32
    scf.if %11 {
      %c0_10 = arith.constant 0 : index
      %c0_11 = arith.constant 0 : index
      %12 = vector.load %arg7[%c0_10, %c0_11] : memref<16x128xf32, #tpu.memory_space<vmem>>, vector<16x128xf32>
      %c0_12 = arith.constant 0 : index
      %c0_13 = arith.constant 0 : index
      %13 = vector.load %arg5[%c0_12, %c0_13] : memref<1x128xf32, #tpu.memory_space<vmem>>, vector<1x128xf32>
      %14 = vector.broadcast %13 : vector<1x128xf32> to vector<16x128xf32>
      %15 = arith.addf %12, %14 : vector<16x128xf32>
      %c0_14 = arith.constant 0 : index
      %c0_15 = arith.constant 0 : index
      %16 = vector.load %arg6[%c0_14, %c0_15] : memref<16x128xf32, #tpu.memory_space<vmem>>, vector<16x128xf32>
      tpu.vector_store %arg6[%c0_14, %c0_15], %15 {strides = array<i32>} : memref<16x128xf32, #tpu.memory_space<vmem>>, vector<16x128xf32>,
    } else {
    }
    return
  }
  func.func @transform_0(%arg0: i32, %arg1: i32, %arg2: i32) -> (i32, i32) {
    %c0_i32 = arith.constant 0 : i32
    return %arg0, %arg2 : i32, i32
  }
  func.func @transform_1(%arg0: i32, %arg1: i32, %arg2: i32) -> (i32, i32) {
    %c0_i32 = arith.constant 0 : i32
    return %arg2, %arg1 : i32, i32
  }
  func.func @transform_2(%arg0: i32, %arg1: i32, %arg2: i32) -> (i32, i32) {
    %c0_i32 = arith.constant 0 : i32
    %c0_i32_0 = arith.constant 0 : i32
    return %c0_i32, %arg1 : i32, i32
  }
  func.func @transform_3(%arg0: i32, %arg1: i32, %arg2: i32) -> (i32, i32) {
    %c0_i32 = arith.constant 0 : i32
    return %arg0, %arg1 : i32, i32
  }
}

</mosaic_0001>

<llo_original>
// kernel: tpu_custom_call.1
$region0: #{tpu_custom_call.1}
  #allocation0 [shape = 'u32[]', space=smem, size = 0x4, offset = 0x4, fixed_abs, tag = 'smem constant byte address 0x4 - core index']
  #allocation1 [shape = 'u32[144,128]{1,0:T(1,128)}', space=vmem, size = 0x12000, scoped, tag = 'internal scratch']
  #allocation2 [shape = 'f32[16,128]{1,0:T(8,128)}', space=vmem, size = 0x2000, scoped, tag = 'scratch operand']
  %s0 = inlined_call_operand.hbm [shape: f32[16,128], index: 0, kind: input, shape index: {}]
  %s1 = inlined_call_operand.hbm [shape: f32[128,128], index: 1, kind: input, shape index: {}]
  %s2 = inlined_call_operand.vmem [shape: f32[1,128], index: 2, kind: input, shape index: {}]
  %s3 = inlined_call_operand.hbm [shape: f32[16,128], index: 3, kind: output, shape index: {}]
  %s4 = sld [smem:[#allocation0]]
  $region38: #{tpu_custom_call.1} parent=0
    _
  %s6 = ssub.s32 1, %s4
  %s7 = scalar_select 0, %s6, %s4
  $region1: #{tpu_custom_call.1} parent=0
    #allocation3 [shape = 'u8[8192]{0}', space=vmem, size = 0x2000, scoped, tag = 'input window, operand 0, single buffered']
    #allocation4 [shape = 's32[1]{0}', space=sflag, size = 0x4, scoped, tag = 'scoped memory for tpu_custom_call.1']
    #allocation5 [shape = 's32[1]{0}', space=sflag, size = 0x4, scoped, tag = 'scoped memory for tpu_custom_call.1']
    #allocation6 [shape = 'u8[65536]{0}', space=vmem, size = 0x10000, scoped, tag = 'input window, operand 1, single buffered']
    #allocation7 [shape = 's32[1]{0}', space=sflag, size = 0x4, scoped, tag = 'scoped memory for tpu_custom_call.1']
    #allocation8 [shape = 'u8[8192]{0}', space=vmem, size = 0x2000, scoped, tag = 'output window, operand 0, single buffered']
    %8 = vsyncpa [#allocation4], 0
    %9 = vsyncpa [#allocation7], 0
    %10 = vsyncpa [#allocation5], 0
    // Predicated region
    $region2: #{tpu_custom_call.1} parent=1 // pred_check
      _
    $region3: #{tpu_custom_call.1} parent=1 // pred_check_branch
      %12 = sbr.rel (0) target = $region5
    $region4: #{tpu_custom_call.1} parent=1 // pred_region
      %s14 = ssub.s32 256, 256
      %15 = vsyncadd [#allocation4], %s14
      %s16 = sshll.u32 [#allocation3], 4
      %s17 = int_to_ptr.vmem [resolvable:$true] %s16
      %22 = dma.hbm_to_vmem [thread:$0]  %s0, 256, %s17, [#allocation4], 128, 128, 8
    $region5: #{tpu_custom_call.1} parent=1 // pred_fallthru
      _
    // Predicated region
    $region6: #{tpu_custom_call.1} parent=1 // pred_check
      _
    $region7: #{tpu_custom_call.1} parent=1 // pred_check_branch
      %24 = sbr.rel (0) target = $region9
    $region8: #{tpu_custom_call.1} parent=1 // pred_region
      %s26 = ssub.s32 2048, 2048
      %27 = vsyncadd [#allocation7], %s26
      %s28 = sshll.u32 [#allocation6], 4
      %s29 = int_to_ptr.vmem [resolvable:$true] %s28
      %34 = dma.hbm_to_vmem [thread:$0]  %s1, 2048, %s29, [#allocation7], 128, 128, 8
    $region9: #{tpu_custom_call.1} parent=1 // pred_fallthru
      _
    // Predicated region
    $region10: #{tpu_custom_call.1} parent=1 // pred_check
      _
    $region11: #{tpu_custom_call.1} parent=1 // pred_check_branch
      %36 = sbr.rel (0) target = $region13
    $region12: #{tpu_custom_call.1} parent=1 // pred_region
      _
    $region13: #{tpu_custom_call.1} parent=1 // pred_fallthru
      _
    // Predicated region
    $region14: #{tpu_custom_call.1} parent=1 // pred_check
      _
    $region15: #{tpu_custom_call.1} parent=1 // pred_check_branch
      %38 = sbr.rel (0) target = $region17
    $region16: #{tpu_custom_call.1} parent=1 // pred_region
      %39 = dma.done [#allocation4], 256
    $region17: #{tpu_custom_call.1} parent=1 // pred_fallthru
      _
    // Predicated region
    $region18: #{tpu_custom_call.1} parent=1 // pred_check
      _
    $region19: #{tpu_custom_call.1} parent=1 // pred_check_branch
      %41 = sbr.rel (0) target = $region21
    $region20: #{tpu_custom_call.1} parent=1 // pred_region
      %42 = dma.done [#allocation7], 2048
    $region21: #{tpu_custom_call.1} parent=1 // pred_fallthru
      _
    %p43 = scmp.eq.s32.totalorder 0, 0
    // Predicated region
    $region22: #{tpu_custom_call.1} parent=1 // pred_check
      %p44 = pneg %p43
    $region23: #{tpu_custom_call.1} parent=1 // pred_check_branch
      %46 = sbr.rel (%p44) target = $region25
    $region24: #{tpu_custom_call.1} parent=1 // pred_region
      %47 = vst [vmem:[#allocation2] sm:$0xff] 0.0
      %48 = vst [vmem:[#allocation2 + $0x8] sm:$0xff] 0.0
    $region25: #{tpu_custom_call.1} parent=1 // pred_fallthru
      _
    %v49 = vld [vmem:[#allocation2] sm:$0xff]
    %v50 = vld [vmem:[#allocation2 + $0x8] sm:$0xff]
    %v51 = vld [vmem:[#allocation3] sm:$0xff]
    %v52 = vld [vmem:[#allocation3 + $0x8] sm:$0xff]
    %v53 = vld [vmem:[#allocation6] sm:$0xff]
    %v54 = vld [vmem:[#allocation6 + $0x8] sm:$0xff]
    %v55 = vld [vmem:[#allocation6 + $0x10] sm:$0xff]
    %v56 = vld [vmem:[#allocation6 + $0x18] sm:$0xff]
    %v57 = vld [vmem:[#allocation6 + $0x20] sm:$0xff]
    %v58 = vld [vmem:[#allocation6 + $0x28] sm:$0xff]
    %v59 = vld [vmem:[#allocation6 + $0x30] sm:$0xff]
    %v60 = vld [vmem:[#allocation6 + $0x38] sm:$0xff]
    %v61 = vld [vmem:[#allocation6 + $0x40] sm:$0xff]
    %v62 = vld [vmem:[#allocation6 + $0x48] sm:$0xff]
    %v63 = vld [vmem:[#allocation6 + $0x50] sm:$0xff]
    %v64 = vld [vmem:[#allocation6 + $0x58] sm:$0xff]
    %v65 = vld [vmem:[#allocation6 + $0x60] sm:$0xff]
    %v66 = vld [vmem:[#allocation6 + $0x68] sm:$0xff]
    %v67 = vld [vmem:[#allocation6 + $0x70] sm:$0xff]
    %v68 = vld [vmem:[#allocation6 + $0x78] sm:$0xff]
    %69 = vmatprep.subr.mxu0 0.0
    %70 = vmatpush1.msra.mxu0 %v53
    %71 = vmatprep.subr.mxu0 0.0
    %72 = vmatpush1.msra.mxu0 %v54
    %73 = vmatprep.subr.mxu0 0.0
    %74 = vmatpush1.msra.mxu0 %v55
    %75 = vmatprep.subr.mxu0 0.0
    %76 = vmatpush1.msra.mxu0 %v56
    %77 = vmatprep.subr.mxu0 0.0
    %78 = vmatpush1.msra.mxu0 %v57
    %79 = vmatprep.subr.mxu0 0.0
    %80 = vmatpush1.msra.mxu0 %v58
    %81 = vmatprep.subr.mxu0 0.0
    %82 = vmatpush1.msra.mxu0 %v59
    %83 = vmatprep.subr.mxu0 0.0
    %84 = vmatpush1.msra.mxu0 %v60
    %85 = vmatprep.subr.mxu0 0.0
    %86 = vmatpush1.msra.mxu0 %v61
    %87 = vmatprep.subr.mxu0 0.0
    %88 = vmatpush1.msra.mxu0 %v62
    %89 = vmatprep.subr.mxu0 0.0
    %90 = vmatpush1.msra.mxu0 %v63
    %91 = vmatprep.subr.mxu0 0.0
    %92 = vmatpush1.msra.mxu0 %v64
    %93 = vmatprep.subr.mxu0 0.0
    %94 = vmatpush1.msra.mxu0 %v65
    %95 = vmatprep.subr.mxu0 0.0
    %96 = vmatpush1.msra.mxu0 %v66
    %97 = vmatprep.subr.mxu0 0.0
    %98 = vmatpush1.msra.mxu0 %v67
    %99 = vmatprep.subr.mxu0 0.0
    %100 = vmatpush1.msra.mxu0 %v68
    %101 = vmatprep.subr.mxu0 0.0
    %102 = vmatpush1.msra.mxu0 0.0
    %103 = vmatprep.subr.mxu0 0.0
    %104 = vmatpush1.msra.mxu0 0.0
    %105 = vmatprep.subr.mxu0 0.0
    %106 = vmatpush1.msra.mxu0 0.0
    %107 = vmatprep.subr.mxu0 0.0
    %108 = vmatpush1.msra.mxu0 0.0
    %109 = vmatprep.subr.mxu0 0.0
    %110 = vmatpush1.msra.mxu0 0.0
    %111 = vmatprep.subr.mxu0 0.0
    %112 = vmatpush1.msra.mxu0 0.0
    %113 = vmatprep.subr.mxu0 0.0
    %114 = vmatpush1.msra.mxu0 0.0
    %115 = vmatprep.subr.mxu0 0.0
    %116 = vmatpush1.msra.mxu0 0.0
    %117 = vmatprep.subr.mxu0 0.0
    %118 = vmatpush1.msra.mxu0 0.0
    %119 = vmatprep.subr.mxu0 0.0
    %120 = vmatpush1.msra.mxu0 0.0
    %121 = vmatprep.subr.mxu0 0.0
    %122 = vmatpush1.msra.mxu0 0.0
    %123 = vmatprep.subr.mxu0 0.0
    %124 = vmatpush1.msra.mxu0 0.0
    %125 = vmatprep.subr.mxu0 0.0
    %126 = vmatpush1.msra.mxu0 0.0
    %127 = vmatprep.subr.mxu0 0.0
    %128 = vmatpush1.msra.mxu0 0.0
    %129 = vmatprep.subr.mxu0 0.0
    %130 = vmatpush1.msra.mxu0 0.0
    %131 = vmatprep.subr.mxu0 0.0
    %132 = vmatpush1.msra.mxu0 0.0
    %133 = vmatprep.mubr.f32.mxu0 0.0
    %134 = vmatmul.mubr.f32.gmra.mrb[0].mxu0 %v51
    %v135 = vpop.f32.mrb[0].mxu0
    %v136 = vadd.f32 0.0, %v135
    %v137 = vpop.f32.mrb[0].mxu0
    %138 = vmatprep.mubr.f32.mxu0 0.0
    %139 = vmatmul.mubr.f32.gmra.mrb[0].mxu0 %v52
    %v140 = vpop.f32.mrb[0].mxu0
    %v141 = vadd.f32 0.0, %v140
    %v142 = vpop.f32.mrb[0].mxu0
    %143 = vdwg.mxu0
    %v144 = vadd.f32 %v49, %v136
    %v145 = vadd.f32 %v50, %v141
    %146 = vst [vmem:[#allocation2] sm:$0xff] %v144
    %147 = vst [vmem:[#allocation2 + $0x8] sm:$0xff] %v145
    // Predicated region
    $region26: #{tpu_custom_call.1} parent=1 // pred_check
      %p148 = pneg %p43
    $region27: #{tpu_custom_call.1} parent=1 // pred_check_branch
      %150 = sbr.rel (%p148) target = $region29
    $region28: #{tpu_custom_call.1} parent=1 // pred_region
      %v151 = vld [vmem:[#allocation2] sm:$0xff]
      %v152 = vld [vmem:[#allocation2 + $0x8] sm:$0xff]
      %v153 = vld [vmem:[%s2] sm:$0x1]
      %v155 = vlaneseq
      %v156 = vshrl.u32 %v155, 7
      %v157 = vsub.s32 0, %v156
      %v158 = vrot.slane %v153, %v157
      %v160 = vadd.f32 %v151, %v158
      %v161 = vadd.f32 %v152, %v158
      %162 = vst [vmem:[#allocation8] sm:$0xff] %v160
      %163 = vst [vmem:[#allocation8 + $0x8] sm:$0xff] %v161
    $region29: #{tpu_custom_call.1} parent=1 // pred_fallthru
      _
    // Predicated region
    $region30: #{tpu_custom_call.1} parent=1 // pred_check
      _
    $region31: #{tpu_custom_call.1} parent=1 // pred_check_branch
      %165 = sbr.rel (0) target = $region33
    $region32: #{tpu_custom_call.1} parent=1 // pred_region
      %s167 = ssub.s32 256, 256
      %168 = vsyncadd [#allocation5], %s167
      %s169 = sshll.u32 [#allocation8], 4
      %s170 = int_to_ptr.vmem [resolvable:$true] %s169
      %175 = dma.vmem_to_hbm [thread:$0]  %s170, 256, %s3, [#allocation5], 128, 128, 8
    $region33: #{tpu_custom_call.1} parent=1 // pred_fallthru
      _
    // Predicated region
    $region34: #{tpu_custom_call.1} parent=1 // pred_check
      _
    $region35: #{tpu_custom_call.1} parent=1 // pred_check_branch
      %177 = sbr.rel (0) target = $region37
    $region36: #{tpu_custom_call.1} parent=1 // pred_region
      %178 = dma.done [#allocation5], 256
    $region37: #{tpu_custom_call.1} parent=1 // pred_fallthru
      _
    %179 = vsyncpa [#allocation4], 1
    %180 = vsyncpa [#allocation7], 1
    %181 = vsyncpa [#allocation5], 1

</llo_original>
